<compile_context>
chip_gen: v7x
topology: tpu7x:2x2x1
jax: 0.10.0
libtpu: 0.0.40
codegen_flags: <defaults>
</compile_context>

<pallas_src>
import jax
import jax.numpy as jnp
from jax.experimental import pallas as pl
from jax.experimental.pallas import tpu as pltpu


def _round_up(x: int, m: int) -> int:
    return ((x + m - 1) // m) * m


def _ensemble_affine(rotation_params, translation_params, scale_params, n_dims):
    """Build the per-batch affine matrix M = [s*R | t] of shape (B, D, D+1).

    rotation_params:    (B, 1) for 2D, (B, 3) for 3D  (roll, pitch, yaw)
    translation_params: (B, D)
    scale_params:       (B, 1)   (isotropic scale)
    """
    s = scale_params[:, 0]
    if n_dims == 2:
        theta = rotation_params[:, 0]
        c, si = jnp.cos(theta), jnp.sin(theta)
        r = jnp.stack([jnp.stack([c, -si], axis=-1),
                       jnp.stack([si, c], axis=-1)], axis=-2)          # (B, 2, 2)
    elif n_dims == 3:
        roll, pitch, yaw = (rotation_params[:, 0], rotation_params[:, 1],
                            rotation_params[:, 2])
        cr, sr = jnp.cos(roll), jnp.sin(roll)
        cp, sp = jnp.cos(pitch), jnp.sin(pitch)
        cy, sy = jnp.cos(yaw), jnp.sin(yaw)
        one, zero = jnp.ones_like(cr), jnp.zeros_like(cr)
        rx = jnp.stack([jnp.stack([one, zero, zero], -1),
                        jnp.stack([zero, cr, -sr], -1),
                        jnp.stack([zero, sr, cr], -1)], -2)
        ry = jnp.stack([jnp.stack([cp, zero, sp], -1),
                        jnp.stack([zero, one, zero], -1),
                        jnp.stack([-sp, zero, cp], -1)], -2)
        rz = jnp.stack([jnp.stack([cy, -sy, zero], -1),
                        jnp.stack([sy, cy, zero], -1),
                        jnp.stack([zero, zero, one], -1)], -2)
        # shapenet convention: R = Rz @ Ry @ Rx
        r = jnp.einsum('bij,bjk,bkl->bil', rz, ry, rx,
                       precision=jax.lax.Precision.HIGHEST)            # (B, 3, 3)
    else:
        raise ValueError("only 2D and 3D homogeneous transforms are supported")

    a = r * s[:, None, None]                                           # (B, D, D)
    m = jnp.concatenate([a, translation_params[:, :, None]], axis=-1)  # (B, D, D+1)
    return m.astype(jnp.float32)


def _hom_trafo_kernel(m_ref, x_ref, o_ref):
    # m_ref: (1, D, D+1) f32   per-batch affine [s*R | t]
    # x_ref: (1, D, TP)  f32   points: dims on sublanes, points on lanes (lane-dense)
    # o_ref: (1, D, TP)  f32
    m = m_ref[0]                       # (D, D+1)
    x = x_ref[0]                       # (D, TP)
    d, tp = x.shape

    # out[i, :] = sum_j m[i, j] * x[j, :] + m[i, D]
    # D <= 3 -> unrolled VPU broadcast-FMAs; translation column seeds the accumulator
    # (fused add, no separate broadcast stream). MXU deliberately unused (~1% util).
    acc = jnp.broadcast_to(m[:, d:d + 1], (d, tp)).astype(jnp.float32)
    for j in range(d):
        acc = acc + m[:, j:j + 1] * x[j:j + 1, :]

    o_ref[0] = acc.astype(o_ref.dtype)


def homogeneous_transform_forward(shapes, rotation_params, translation_params,
                                  scale_params, *, tile_p=2048):
    """JAX/Pallas equivalent of _HomogeneousTransformationLayerCpp.forward.

    shapes:             (B, P, D) float32, D in {2, 3}
    rotation_params:    (B, 1[, 1, 1]) for 2D, (B, 3[, 1, 1]) for 3D
    translation_params: (B, D[, 1, 1])
    scale_params:       (B, 1[, 1, 1])
    returns:            (B, P, D) float32 transformed shapes (cartesian coords)
    """
    shapes = jnp.asarray(shapes, jnp.float32)
    B, P, D = shapes.shape
    assert D in (2, 3), "only 2D / 3D supported by this layer"

    rp = jnp.asarray(rotation_params, jnp.float32).reshape(B, -1)
    tr = jnp.asarray(translation_params, jnp.float32).reshape(B, -1)
    sc = jnp.asarray(scale_params, jnp.float32).reshape(B, -1)

    m = _ensemble_affine(rp, tr, sc, D)                 # (B, D, D+1)

    # Lane-dense layout: points on the last (lane) axis, padded to the tile size.
    x_t = jnp.swapaxes(shapes, 1, 2)                    # (B, D, P)
    tp = _round_up(min(int(tile_p), _round_up(P, 128)), 128)
    p_pad = _round_up(P, tp)
    if p_pad != P:
        x_t = jnp.pad(x_t, ((0, 0), (0, 0), (0, p_pad - P)))

    grid = (B, p_pad // tp)

    out = pl.pallas_call(
        _hom_trafo_kernel,
        out_shape=jax.ShapeDtypeStruct((B, D, p_pad), jnp.float32),
        grid_spec=pltpu.PrefetchScalarGridSpec(
            num_scalar_prefetch=0,
            grid=grid,
            in_specs=[
                # tiny per-batch matrix: constant across the point-tile axis
                pl.BlockSpec((1, D, D + 1), lambda b, j: (b, 0, 0)),
                # streamed, double-buffered point tiles (lane-dense)
                pl.BlockSpec((1, D, tp), lambda b, j: (b, 0, j)),
            ],
            out_specs=pl.BlockSpec((1, D, tp), lambda b, j: (b, 0, j)),
        ),
        compiler_params=pltpu.CompilerParams(
            dimension_semantics=("parallel", "parallel")),
    )(m, x_t)

    out = out[:, :, :P]                                 # drop point padding
    return jnp.swapaxes(out, 1, 2)                      # (B, P, D)


def reference_forward(shapes, rotation_params, translation_params, scale_params):
    """Pure-JAX reference mirroring the PyTorch/C++ semantics (full homogeneous bmm)."""
    shapes = jnp.asarray(shapes, jnp.float32)
    B, P, D = shapes.shape
    rp = jnp.asarray(rotation_params, jnp.float32).reshape(B, -1)
    tr = jnp.asarray(translation_params, jnp.float32).reshape(B, -1)
    sc = jnp.asarray(scale_params, jnp.float32).reshape(B, -1)

    m = _ensemble_affine(rp, tr, sc, D)                              # (B, D, D+1)
    bottom = jnp.concatenate([jnp.zeros((B, 1, D), jnp.float32),
                              jnp.ones((B, 1, 1), jnp.float32)], axis=-1)
    trafo = jnp.concatenate([m, bottom], axis=1)                     # (B, D+1, D+1)

    hom = jnp.concatenate([shapes, jnp.ones((B, P, 1), jnp.float32)], axis=-1)
    # torch.bmm(hom, trafo.permute(0, 2, 1)), computed elementwise in f32
    out = jnp.sum(hom[:, :, None, :] * trafo[:, None, :, :], axis=-1)  # (B, P, D+1)
    return out[..., :D]


if __name__ == "__main__":
    key = jax.random.PRNGKey(0)
    k1, k2, k3, k4 = jax.random.split(key, 4)

    # --- 2D case: B=2, 68 landmarks (typical shapenet), PyTorch-style (B, k, 1, 1) params
    B, P, D = 2, 68, 2
    shapes2 = jax.random.normal(k1, (B, P, D), dtype=jnp.float32)
    rot2 = jax.random.normal(k2, (B, 1, 1, 1), dtype=jnp.float32)
    trans2 = jax.random.normal(k3, (B, 2, 1, 1), dtype=jnp.float32)
    scale2 = jax.random.uniform(k4, (B, 1, 1, 1), dtype=jnp.float32,
                                minval=0.5, maxval=1.5)

    out2 = jax.block_until_ready(
        homogeneous_transform_forward(shapes2, rot2, trans2, scale2))
    ref2 = reference_forward(shapes2, rot2, trans2, scale2)
    assert out2.shape == (B, P, D)
    assert jnp.allclose(out2, ref2, atol=1e-5, rtol=1e-5)

    # --- 3D case with several point tiles to exercise the pipelined (parallel) grid
    B3, P3, D3 = 2, 300, 3
    k5, k6, k7, k8 = jax.random.split(k1, 4)
    shapes3 = jax.random.normal(k5, (B3, P3, D3), dtype=jnp.float32)
    rot3 = jax.random.normal(k6, (B3, 3, 1, 1), dtype=jnp.float32)
    trans3 = jax.random.normal(k7, (B3, 3, 1, 1), dtype=jnp.float32)
    scale3 = jax.random.uniform(k8, (B3, 1, 1, 1), dtype=jnp.float32,
                                minval=0.5, maxval=1.5)

    out3 = jax.block_until_ready(
        homogeneous_transform_forward(shapes3, rot3, trans3, scale3, tile_p=128))
    ref3 = reference_forward(shapes3, rot3, trans3, scale3)
    assert out3.shape == (B3, P3, D3)
    assert jnp.allclose(out3, ref3, atol=1e-5, rtol=1e-5)

    print("KERNEL_OK")
</pallas_src>

<mosaic_0001>
module attributes {stable_mosaic.version = 11 : i64} {
  func.func @_hom_trafo_kernel(%arg0: i32, %arg1: i32, %arg2: memref<1x2x3xf32, #tpu.memory_space<vmem>>, %arg3: memref<1x2x128xf32, #tpu.memory_space<vmem>>, %arg4: memref<1x2x128xf32, #tpu.memory_space<vmem>>) attributes {dimension_semantics = [#tpu.dimension_semantics<parallel>, #tpu.dimension_semantics<parallel>], iteration_bounds = array<i64: 2, 1>, scalar_prefetch = 0 : i64, scratch_operands = 0 : i64, tpu.core_type = #tpu.core_type<tc>, window_params = [{transform_indices = @transform_0, window_bounds = array<i64: 1, 2, 3>}, {transform_indices = @transform_1, window_bounds = array<i64: 1, 2, 128>}, {transform_indices = @transform_2, window_bounds = array<i64: 1, 2, 128>}]} {
    %c0 = arith.constant 0 : index
    %c0_0 = arith.constant 0 : index
    %c0_1 = arith.constant 0 : index
    %0 = vector.load %arg2[%c0, %c0_0, %c0_1] : memref<1x2x3xf32, #tpu.memory_space<vmem>>, vector<1x2x3xf32>
    %1 = vector.shape_cast %0 : vector<1x2x3xf32> to vector<2x3xf32>
    %c0_2 = arith.constant 0 : index
    %c0_3 = arith.constant 0 : index
    %c0_4 = arith.constant 0 : index
    %2 = vector.load %arg3[%c0_2, %c0_3, %c0_4] : memref<1x2x128xf32, #tpu.memory_space<vmem>>, vector<1x2x128xf32>
    %3 = vector.shape_cast %2 : vector<1x2x128xf32> to vector<2x128xf32>
    %4 = vector.extract_strided_slice %1 {offsets = [0, 2], sizes = [2, 1], strides = [1, 1]} : vector<2x3xf32> to vector<2x1xf32>
    %5 = vector.shape_cast %4 : vector<2x1xf32> to vector<2x1xf32>
    %6 = vector.broadcast %5 : vector<2x1xf32> to vector<2x128xf32>
    %7 = vector.extract_strided_slice %1 {offsets = [0, 0], sizes = [2, 1], strides = [1, 1]} : vector<2x3xf32> to vector<2x1xf32>
    %8 = vector.extract_strided_slice %3 {offsets = [0, 0], sizes = [1, 128], strides = [1, 1]} : vector<2x128xf32> to vector<1x128xf32>
    %9 = vector.broadcast %7 : vector<2x1xf32> to vector<2x128xf32>
    %10 = vector.broadcast %8 : vector<1x128xf32> to vector<2x128xf32>
    %11 = arith.mulf %9, %10 : vector<2x128xf32>
    %12 = arith.addf %6, %11 : vector<2x128xf32>
    %13 = vector.extract_strided_slice %1 {offsets = [0, 1], sizes = [2, 1], strides = [1, 1]} : vector<2x3xf32> to vector<2x1xf32>
    %14 = vector.extract_strided_slice %3 {offsets = [1, 0], sizes = [1, 128], strides = [1, 1]} : vector<2x128xf32> to vector<1x128xf32>
    %15 = vector.broadcast %13 : vector<2x1xf32> to vector<2x128xf32>
    %16 = vector.broadcast %14 : vector<1x128xf32> to vector<2x128xf32>
    %17 = arith.mulf %15, %16 : vector<2x128xf32>
    %18 = arith.addf %12, %17 : vector<2x128xf32>
    %c0_5 = arith.constant 0 : index
    %c0_6 = arith.constant 0 : index
    %c0_7 = arith.constant 0 : index
    %19 = vector.load %arg4[%c0_5, %c0_6, %c0_7] : memref<1x2x128xf32, #tpu.memory_space<vmem>>, vector<1x2x128xf32>
    %20 = vector.shape_cast %19 : vector<1x2x128xf32> to vector<2x128xf32>
    %21 = vector.shape_cast %18 : vector<2x128xf32> to vector<1x2x128xf32>
    tpu.vector_store %arg4[%c0_5, %c0_6, %c0_7], %21 {strides = array<i32>} : memref<1x2x128xf32, #tpu.memory_space<vmem>>, vector<1x2x128xf32>,
    return
  }
  func.func @transform_0(%arg0: i32, %arg1: i32) -> (i32, i32, i32) {
    %c0_i32 = arith.constant 0 : i32
    %c0_i32_0 = arith.constant 0 : i32
    %c0_i32_1 = arith.constant 0 : i32
    return %arg0, %c0_i32, %c0_i32_0 : i32, i32, i32
  }
  func.func @transform_1(%arg0: i32, %arg1: i32) -> (i32, i32, i32) {
    %c0_i32 = arith.constant 0 : i32
    %c0_i32_0 = arith.constant 0 : i32
    return %arg0, %c0_i32, %arg1 : i32, i32, i32
  }
  func.func @transform_2(%arg0: i32, %arg1: i32) -> (i32, i32, i32) {
    %c0_i32 = arith.constant 0 : i32
    %c0_i32_0 = arith.constant 0 : i32
    return %arg0, %c0_i32, %arg1 : i32, i32, i32
  }
}

</mosaic_0001>

<llo_original>
// kernel: tpu_custom_call.1
$region0: #{tpu_custom_call.1}
  #allocation0 [shape = 'u32[]', space=smem, size = 0x4, offset = 0x4, fixed_abs, tag = 'smem constant byte address 0x4 - core index']
  #allocation1 [shape = 'u32[144,128]{1,0:T(1,128)}', space=vmem, size = 0x12000, scoped, tag = 'internal scratch']
  %s0 = inlined_call_operand.hbm [shape: f32[2,2,3], index: 0, kind: input, shape index: {}]
  %s1 = inlined_call_operand.hbm [shape: f32[2,2,128], index: 1, kind: input, shape index: {}]
  %s2 = inlined_call_operand.hbm [shape: f32[2,2,128], index: 2, kind: output, shape index: {}]
  %s3 = sld [smem:[#allocation0]]
  $region49: #{tpu_custom_call.1} parent=0
    _
  %s5 = ssub.s32 1, %s3
  %s6 = scalar_select 0, %s5, %s3
  $region1: #{tpu_custom_call.1} parent=0
    #allocation2 [shape = 'u8[2048]{0}', space=vmem, size = 0x800, scoped, tag = 'input window, operand 0']
    #allocation3 [shape = 's32[2]{0}', space=sflag, size = 0x8, scoped, tag = 'scoped memory for tpu_custom_call.1']
    #allocation4 [shape = 's32[2]{0}', space=sflag, size = 0x8, scoped, tag = 'scoped memory for tpu_custom_call.1']
    #allocation5 [shape = 'u8[2048]{0}', space=vmem, size = 0x800, scoped, tag = 'input window, operand 1']
    #allocation6 [shape = 's32[2]{0}', space=sflag, size = 0x8, scoped, tag = 'scoped memory for tpu_custom_call.1']
    #allocation7 [shape = 'u8[2048]{0}', space=vmem, size = 0x800, scoped, tag = 'output window, operand 0']
    %7 = vsyncpa [#allocation3], 0
    %s8 = scalar_lea.sflag [#allocation3], 1
    %9 = vsyncpa %s8, 0
    %10 = vsyncpa [#allocation6], 0
    %s11 = scalar_lea.sflag [#allocation6], 1
    %12 = vsyncpa %s11, 0
    %13 = vsyncpa [#allocation4], 0
    %s14 = scalar_lea.sflag [#allocation4], 1
    %15 = vsyncpa %s14, 0
    loop: start=0, step=1, limit=4
    $region2: #{tpu_custom_call.1} parent=1 // loop_pre_header
      _
    $region3: #{tpu_custom_call.1} parent=1 // loop_header
      %s17 = sphi 0, %s21
      %p18 = scmp.ge.s32.totalorder %s17, 4
      %s24 = sphi 0, %s36
      %s25 = sphi 0, %s32
      %s26 = sphi 0, %s24
      %s27 = sphi 0, %s25
      %s28 = sphi 0, %s26
      %s29 = sphi 0, %s27
      %s39 = sphi 0, %s41
      %s42 = sphi 0, %s39
      %s43 = sphi 0, %s42
      %s59 = sphi 0, %s43
      %s67 = sphi 0, %s69
      %s70 = sphi 0, %s67
      %s71 = sphi 0, %s70
      %s87 = sphi 0, %s71
      %s95 = sphi 0, %s97
      %s98 = sphi 0, %s95
      %s99 = sphi 0, %s98
      %s115 = sphi 0, %s99
    $region4: #{tpu_custom_call.1} parent=1 // loop_header_branch
      %20 = sbr.rel (%p18) target = $region8
    $region5: #{tpu_custom_call.1} parent=1 // loop_body
      %s22 = ssub.s32 %s17, 1
      %s23 = ssub.s32 %s17, 2
      %s30 = sadd.s32 1, %s25
      %p31 = scmp.ge.s32.totalorder %s30, 1
      %s32 = scalar_select %p31, 0, %s30
      %s33 = sadd.s32 1, %s24
      %s34 = scalar_select %p31, %s33, %s24
      %p35 = scmp.ge.s32.totalorder %s34, 2
      %s36 = scalar_select %p35, 0, %s34
      %s37 = ssub.s32 %s24, %s36
      %p38 = scmp.eq.s32.totalorder %s37, 0
      %s40 = sadd.s32 %s39, 1
      %s41 = scalar_select %p38, %s39, %s40
      %p44 = pneg %p38
      %p45 = scmp.eq.s32.totalorder %s17, 1
      %p46 = por %p44, %p45
      %p47 = scmp.ne.s32.totalorder %s39, %s42
      %p48 = scmp.eq.s32.totalorder %s17, 0
      %p49 = por %p47, %p48
      %p50 = scmp.ne.s32.totalorder %s39, %s42
      %p51 = scmp.eq.s32.totalorder %s22, 1
      %p52 = por %p50, %p51
      %p53 = scmp.ne.s32.totalorder %s42, %s43
      %p54 = scmp.eq.s32.totalorder %s22, 0
      %p55 = por %p53, %p54
      %p56 = scmp.ne.s32.totalorder %s42, %s43
      %p57 = scmp.eq.s32.totalorder %s23, 1
      %p58 = por %p56, %p57
      %p60 = scmp.ne.s32.totalorder %s43, %s59
      %p61 = scmp.eq.s32.totalorder %s23, 0
      %p62 = por %p60, %p61
      %s63 = ssub.s32 %s24, %s36
      %s64 = ssub.s32 %s25, %s32
      %s65 = sor.u32 %s63, %s64
      %p66 = scmp.eq.s32.totalorder %s65, 0
      %s68 = sadd.s32 %s67, 1
      %s69 = scalar_select %p66, %s67, %s68
      %p72 = pneg %p66
      %p73 = scmp.eq.s32.totalorder %s17, 1
      %p74 = por %p72, %p73
      %p75 = scmp.ne.s32.totalorder %s67, %s70
      %p76 = scmp.eq.s32.totalorder %s17, 0
      %p77 = por %p75, %p76
      %p78 = scmp.ne.s32.totalorder %s67, %s70
      %p79 = scmp.eq.s32.totalorder %s22, 1
      %p80 = por %p78, %p79
      %p81 = scmp.ne.s32.totalorder %s70, %s71
      %p82 = scmp.eq.s32.totalorder %s22, 0
      %p83 = por %p81, %p82
      %p84 = scmp.ne.s32.totalorder %s70, %s71
      %p85 = scmp.eq.s32.totalorder %s23, 1
      %p86 = por %p84, %p85
      %p88 = scmp.ne.s32.totalorder %s71, %s87
      %p89 = scmp.eq.s32.totalorder %s23, 0
      %p90 = por %p88, %p89
      %s91 = ssub.s32 %s24, %s36
      %s92 = ssub.s32 %s25, %s32
      %s93 = sor.u32 %s91, %s92
      %p94 = scmp.eq.s32.totalorder %s93, 0
      %s96 = sadd.s32 %s95, 1
      %s97 = scalar_select %p94, %s95, %s96
      %p100 = pneg %p94
      %p101 = scmp.eq.s32.totalorder %s17, 1
      %p102 = por %p100, %p101
      %p103 = scmp.ne.s32.totalorder %s95, %s98
      %p104 = scmp.eq.s32.totalorder %s17, 0
      %p105 = por %p103, %p104
      %p106 = scmp.ne.s32.totalorder %s95, %s98
      %p107 = scmp.eq.s32.totalorder %s22, 1
      %p108 = por %p106, %p107
      %p109 = scmp.ne.s32.totalorder %s98, %s99
      %p110 = scmp.eq.s32.totalorder %s22, 0
      %p111 = por %p109, %p110
      %p112 = scmp.ne.s32.totalorder %s98, %s99
      %p113 = scmp.eq.s32.totalorder %s23, 1
      %p114 = por %p112, %p113
      %p116 = scmp.ne.s32.totalorder %s99, %s115
      %p117 = scmp.eq.s32.totalorder %s23, 0
      %p118 = por %p116, %p117
      %p119 = scmp.le.s32.totalorder 1, %s17
      %p120 = scmp.lt.s32.totalorder %s17, 3
      %p121 = pnand %p119, %p120
      %p122 = pneg %p121
      // Predicated region
      $region9: #{tpu_custom_call.1} parent=5 // pred_check
        _
      $region10: #{tpu_custom_call.1} parent=5 // pred_check_branch
        %124 = sbr.rel (%p121) target = $region12
      $region11: #{tpu_custom_call.1} parent=5 // pred_region
        %s125 = ssub.s32 %s17, 1
      $region12: #{tpu_custom_call.1} parent=5 // pred_fallthru
        _
      %p126 = scmp.lt.s32.totalorder %s17, 2
      // Predicated region
      $region13: #{tpu_custom_call.1} parent=5 // pred_check
        %p127 = pneg %p126
      $region14: #{tpu_custom_call.1} parent=5 // pred_check_branch
        %129 = sbr.rel (%p127) target = $region16
      $region15: #{tpu_custom_call.1} parent=5 // pred_region
        // Predicated region
        $region17: #{tpu_custom_call.1} parent=15 // pred_check
          %p130 = pneg %p49
        $region18: #{tpu_custom_call.1} parent=15 // pred_check_branch
          %132 = sbr.rel (%p130) target = $region20
        $region19: #{tpu_custom_call.1} parent=15 // pred_region
          %s133 = sand.u32 %s39, 1
          %s134 = scalar_lea.sflag [#allocation3], %s133
          %s135 = sand.u32 %s39, 1
          %s136 = smul.addr %s135, 2
          %s137 = scalar_lea.vmem [#allocation2], %s136
          %s139 = ssub.s32 32, 32
          %140 = vsyncadd %s134, %s139
          %s141 = smul.addr %s24, 32
          %s142 = scalar_lea.hbm %s0, %s141
          %s144 = sshll.u32 %s137, 4
          %s145 = int_to_ptr.vmem [resolvable:$true] %s144
          %147 = dma.hbm_to_vmem [thread:$0]  %s142, 32, %s145, %s134
        $region20: #{tpu_custom_call.1} parent=15 // pred_fallthru
          _
        // Predicated region
        $region21: #{tpu_custom_call.1} parent=15 // pred_check
          %p148 = pneg %p77
        $region22: #{tpu_custom_call.1} parent=15 // pred_check_branch
          %150 = sbr.rel (%p148) target = $region24
        $region23: #{tpu_custom_call.1} parent=15 // pred_region
          %s151 = sand.u32 %s67, 1
          %s152 = scalar_lea.sflag [#allocation6], %s151
          %s153 = sand.u32 %s67, 1
          %s154 = smul.addr %s153, 2
          %s155 = scalar_lea.vmem [#allocation5], %s154
          %s157 = ssub.s32 32, 32
          %158 = vsyncadd %s152, %s157
          %s159 = sadd.s32 %s25, %s24
          %s160 = smul.addr %s159, 32
          %s161 = scalar_lea.hbm %s1, %s160
          %s163 = sshll.u32 %s155, 4
          %s164 = int_to_ptr.vmem [resolvable:$true] %s163
          %166 = dma.hbm_to_vmem [thread:$0]  %s161, 32, %s164, %s152
        $region24: #{tpu_custom_call.1} parent=15 // pred_fallthru
          _
      $region16: #{tpu_custom_call.1} parent=5 // pred_fallthru
        _
      %p167 = scmp.le.s32.totalorder 1, %s17
      %p168 = scmp.lt.s32.totalorder %s17, 3
      %p169 = pnand %p167, %p168
      %p170 = pneg %p169
      // Predicated region
      $region25: #{tpu_custom_call.1} parent=5 // pred_check
        _
      $region26: #{tpu_custom_call.1} parent=5 // pred_check_branch
        %172 = sbr.rel (%p169) target = $region28
      $region27: #{tpu_custom_call.1} parent=5 // pred_region
        %s173 = ssub.s32 %s17, 1
        %s174 = sand.u32 %s42, 1
        %s175 = scalar_lea.sflag [#allocation3], %s174
        %s176 = sand.u32 %s42, 1
        %s177 = smul.addr %s176, 2
        %s178 = scalar_lea.vmem [#allocation2], %s177
        // Predicated region
        $region29: #{tpu_custom_call.1} parent=27 // pred_check
          %p179 = pneg %p55
        $region30: #{tpu_custom_call.1} parent=27 // pred_check_branch
          %181 = sbr.rel (%p179) target = $region32
        $region31: #{tpu_custom_call.1} parent=27 // pred_region
          %182 = dma.done %s175, 32
        $region32: #{tpu_custom_call.1} parent=27 // pred_fallthru
          _
        %s183 = sand.u32 %s70, 1
        %s184 = scalar_lea.sflag [#allocation6], %s183
        %s185 = sand.u32 %s70, 1
        %s186 = smul.addr %s185, 2
        %s187 = scalar_lea.vmem [#allocation5], %s186
        // Predicated region
        $region33: #{tpu_custom_call.1} parent=27 // pred_check
          %p188 = pneg %p83
        $region34: #{tpu_custom_call.1} parent=27 // pred_check_branch
          %190 = sbr.rel (%p188) target = $region36
        $region35: #{tpu_custom_call.1} parent=27 // pred_region
          %191 = dma.done %s184, 32
        $region36: #{tpu_custom_call.1} parent=27 // pred_fallthru
          _
        %s192 = sand.u32 %s42, 1
        %s193 = scalar_lea.sflag [#allocation3], %s192
        %s194 = sand.u32 %s42, 1
        %s195 = smul.addr %s194, 2
        %s196 = scalar_lea.vmem [#allocation2], %s195
        %p197 = pneg %p55
        %p198 = pneg %p52
        %s199 = sand.u32 %s70, 1
        %s200 = scalar_lea.sflag [#allocation6], %s199
        %s201 = sand.u32 %s70, 1
        %s202 = smul.addr %s201, 2
        %s203 = scalar_lea.vmem [#allocation5], %s202
        %p204 = pneg %p83
        %p205 = pneg %p80
        %p206 = pneg %p111
        %p207 = pneg %p108
        %s208 = sand.u32 %s98, 1
        %s209 = scalar_lea.sflag [#allocation4], %s208
        %s210 = sand.u32 %s98, 1
        %s211 = smul.addr %s210, 2
        %s212 = scalar_lea.vmem [#allocation7], %s211
        %v213 = vld [vmem:[%s178] sm:$0x3]
        %v214 = vld [vmem:[%s187] sm:$0x3]
        %216 = vset.pattern.permute.xlu0 2
        %217 = vperm.xlu0 %216, %v213
        %v218 = vpop.permute.xlu0 %217
        %220 = vset.pattern.permute.xlu0 0
        %221 = vperm.xlu0 %220, %v213
        %v222 = vpop.permute.xlu0 %221
        %v224 = vlaneseq
        %v225 = vshrl.u32 %v224, 7
        %v226 = vsub.s32 0, %v225
        %v227 = vrot.slane %v214, %v226
        %v228 = vmul.f32 %v222, %v227
        %v229 = vadd.f32 %v218, %v228
        %230 = vset.pattern.permute.xlu0 1
        %231 = vperm.xlu0 %230, %v213
        %v232 = vpop.permute.xlu0 %231
        %v234 = vlaneseq
        %v235 = vshrl.u32 %v234, 7
        %v236 = vsub.s32 1, %v235
        %v237 = vrot.slane %v214, %v236
        %v238 = vmul.f32 %v232, %v237
        %v239 = vadd.f32 %v229, %v238
        %240 = vst [vmem:[%s212] sm:$0x3] %v239
        %s241 = sand.u32 %s98, 1
        %s242 = scalar_lea.sflag [#allocation4], %s241
        %s243 = sand.u32 %s98, 1
        %s244 = smul.addr %s243, 2
        %s245 = scalar_lea.vmem [#allocation7], %s244
        // Predicated region
        $region37: #{tpu_custom_call.1} parent=27 // pred_check
          %p246 = pneg %p108
        $region38: #{tpu_custom_call.1} parent=27 // pred_check_branch
          %248 = sbr.rel (%p246) target = $region40
        $region39: #{tpu_custom_call.1} parent=27 // pred_region
          %s250 = ssub.s32 32, 32
          %251 = vsyncadd %s242, %s250
          %s252 = sadd.s32 %s27, %s26
          %s253 = smul.addr %s252, 32
          %s254 = scalar_lea.hbm %s2, %s253
          %s256 = sshll.u32 %s245, 4
          %s257 = int_to_ptr.vmem [resolvable:$true] %s256
          %259 = dma.vmem_to_hbm [thread:$0]  %s257, 32, %s254, %s242
        $region40: #{tpu_custom_call.1} parent=27 // pred_fallthru
          _
      $region28: #{tpu_custom_call.1} parent=5 // pred_fallthru
        _
      %p260 = scmp.le.s32.totalorder 2, %s17
      // Predicated region
      $region41: #{tpu_custom_call.1} parent=5 // pred_check
        %p261 = pneg %p260
      $region42: #{tpu_custom_call.1} parent=5 // pred_check_branch
        %263 = sbr.rel (%p261) target = $region44
      $region43: #{tpu_custom_call.1} parent=5 // pred_region
        %s264 = ssub.s32 %s17, 2
        // Predicated region
        $region45: #{tpu_custom_call.1} parent=43 // pred_check
          %p265 = pneg %p114
        $region46: #{tpu_custom_call.1} parent=43 // pred_check_branch
          %267 = sbr.rel (%p265) target = $region48
        $region47: #{tpu_custom_call.1} parent=43 // pred_region
          %s268 = sand.u32 %s99, 1
          %s269 = scalar_lea.sflag [#allocation4], %s268
          %s270 = sand.u32 %s99, 1
          %s271 = smul.addr %s270, 2
          %s272 = scalar_lea.vmem [#allocation7], %s271
          %273 = dma.done %s269, 32
        $region48: #{tpu_custom_call.1} parent=43 // pred_fallthru
          _
      $region44: #{tpu_custom_call.1} parent=5 // pred_fallthru
        _
    $region6: #{tpu_custom_call.1} parent=1 // loop_footer
      %s21 = sadd.s32 1, %s17
    $region7: #{tpu_custom_call.1} parent=1 // loop_footer_branch
      %16 = sbr.rel target = $region3
    $region8: #{tpu_custom_call.1} parent=1 // loop_exit
      _
    %274 = vsyncpa [#allocation3], 1
    %s275 = scalar_lea.sflag [#allocation3], 1
    %276 = vsyncpa %s275, 1
    %277 = vsyncpa [#allocation6], 1
    %s278 = scalar_lea.sflag [#allocation6], 1
    %279 = vsyncpa %s278, 1
    %280 = vsyncpa [#allocation4], 1
    %s281 = scalar_lea.sflag [#allocation4], 1
    %282 = vsyncpa %s281, 1

</llo_original>
